<compile_context>
chip_gen: v6e
topology: v6e:2x2x1
jax: 0.10.0
libtpu: 0.0.40
codegen_flags: <defaults>
</compile_context>

<pallas_src>
import functools

import jax
import jax.numpy as jnp
import numpy as np
from jax.experimental import pallas as pl
from jax.experimental.pallas import tpu as pltpu


def _channel_attention_kernel(x_ref, wq_ref, wk_ref, wvt_ref, wproj_ref,
                              bias_ref, mask_ref, o_ref, g_acc, m_acc,
                              *, scale, op_dtype):
    """Two-phase channel attention on (Bblk, C, Ntile) tiles.

    Grid = (batch_block, phase, n_tile).
      phase 0: accumulate G = x x^T over N tiles; at the last tile compute the
               fused projection M = Wproj softmax(scale*Wk G Wv^T + mask) Wq.
      phase 1: stream out = M @ x_tile + bias.

    x_ref    : (Bblk, C, Nt)  input tile (channels x flattened spatial)
    wq_ref   : (C, C)  q rows of qkv weight, PyTorch (out, in)
    wk_ref   : (C, C)  k rows
    wvt_ref  : (C, C)  v rows, pre-transposed to (in, out)
    wproj_ref: (C, C)  proj weight, (out, in)
    bias_ref : (C, 1)  proj bias column (lane broadcast)
    mask_ref : (C, C)  additive block-diagonal head mask (0 / -1e30), f32
    o_ref    : (Bblk, C, Nt)  output tile
    g_acc    : (Bblk, C, C) f32 scratch — running x x^T accumulator
    m_acc    : (Bblk, C, C) f32 scratch — fused projection M
    """
    phase = pl.program_id(1)
    n_idx = pl.program_id(2)
    n_num = pl.num_programs(2)
    bblk = x_ref.shape[0]

    # ---- Phase 0: accumulate G; on the last N tile, derive M from G. -------
    @pl.when(phase == 0)
    def _():
        @pl.when(n_idx == 0)
        def _():
            g_acc[...] = jnp.zeros_like(g_acc)

        x_op = x_ref[...].astype(op_dtype)        # bf16 MXU operands, f32 acc
        g_acc[...] += jnp.einsum("bin,bjn->bij", x_op, x_op,
                                 preferred_element_type=jnp.float32)

        @pl.when(n_idx == n_num - 1)
        def _():
            # Tiny (C,C) algebra, kept in f32.  Static per-batch-element loop
            # of plain (m,k)@(k,n) 2-D matmuls — no weight broadcasts over the
            # batch, no big intermediates, no in-kernel transposes.
            wq = wq_ref[...]
            wk = wk_ref[...]
            wvt = wvt_ref[...]
            wproj = wproj_ref[...]
            mask = mask_ref[...]
            for bb in range(bblk):
                g = g_acc[bb]                                     # (C, C) f32
                s = jnp.dot(wk,
                            jnp.dot(g, wvt,
                                    preferred_element_type=jnp.float32),
                            preferred_element_type=jnp.float32)
                s = s * scale + mask          # mask BEFORE softmax (additive)
                s = s - jnp.max(s, axis=-1, keepdims=True)
                p = jnp.exp(s)                # masked entries underflow to 0
                a = p * pl.reciprocal(jnp.sum(p, axis=-1, keepdims=True),
                                      approx=True)
                m = jnp.dot(wproj,
                            jnp.dot(a, wq,
                                    preferred_element_type=jnp.float32),
                            preferred_element_type=jnp.float32)
                m_acc[bb] = m

    # ---- Phase 1: stream output tiles: out = M @ x_tile + bias. ------------
    @pl.when(phase == 1)
    def _():
        x_op = x_ref[...].astype(op_dtype)
        m_op = m_acc[...].astype(op_dtype)
        out = jnp.einsum("boc,bcn->bon", m_op, x_op,
                         preferred_element_type=jnp.float32)
        out = out + bias_ref[...][None, :, :]                    # (1, C, 1)
        o_ref[...] = out.astype(o_ref.dtype)


def channel_attention(x, w_qkv, w_proj, b_proj, *, num_heads,
                      max_batch_block=8, min_batch_grid=4, max_n_tile=2048,
                      cast_f32_to_bf16=True,
                      vmem_limit_bytes=32 * 1024 * 1024):
    """x: (bs, c, h, w) NCHW.  Weights in PyTorch nn.Linear convention:
       w_qkv: (3C, C), w_proj: (C, C), b_proj: (C,)."""
    bs, c, h, w = x.shape
    n = h * w
    assert c % num_heads == 0
    head_dim = c // num_heads
    scale = float(head_dim) ** (-0.5)

    # (bs, c, h, w) -> (bs, c, n): pure reshape, no HBM transpose; output
    # stores stay lane-dense along N.
    x_cn = x.reshape(bs, c, n)

    # Trace-time weight prep (all tiny): split qkv and pre-transpose Wv so
    # every in-kernel (C,C) product is a plain (m,k)@(k,n) matmul; keep the
    # softmax-path weights in f32.
    w_qkv = jnp.asarray(w_qkv).astype(jnp.float32)
    wq = w_qkv[0 * c:1 * c, :]
    wk = w_qkv[1 * c:2 * c, :]
    wvt = w_qkv[2 * c:3 * c, :].T
    wproj = jnp.asarray(w_proj).astype(jnp.float32)
    bias_col = jnp.asarray(b_proj).astype(jnp.float32).reshape(c, 1)

    # Block-diagonal head mask as a trace-time additive constant (0 / -1e30).
    head_of = np.arange(c) // head_dim
    mask_bias = jnp.asarray(
        np.where(head_of[:, None] == head_of[None, :], 0.0, -1e30)
        .astype(np.float32))

    # Batch block: largest divisor of bs that still leaves >= min_batch_grid
    # steps on the (parallel) batch axis — keeps v7x's two TensorCores busy
    # and gives the software pipeline iterations to overlap.  Falls back to
    # bblk = 1 (grid = bs) for tiny batches like the demo.
    bblk = 1
    for d in range(1, min(bs, max_batch_block) + 1):
        if bs % d == 0 and bs // d >= min_batch_grid:
            bblk = d

    # N tile: largest multiple-of-128 divisor of N under the cap; otherwise
    # fall back to a single full-N block.
    tn = n
    if n % 128 == 0:
        cap = max(128, max_n_tile)
        t = 128
        while t <= min(n, cap):
            if n % t == 0:
                tn = t
            t += 128
    # TODO(synk): N not a multiple of 128 falls back to a single N block.

    op_dtype = (jnp.bfloat16
                if (x.dtype == jnp.float32 and cast_f32_to_bf16)
                else x.dtype)

    grid = (bs // bblk, 2, n // tn)

    kernel = functools.partial(_channel_attention_kernel,
                               scale=scale, op_dtype=op_dtype)

    out_cn = pl.pallas_call(
        kernel,
        out_shape=jax.ShapeDtypeStruct((bs, c, n), x.dtype),
        grid=grid,
        in_specs=[
            pl.BlockSpec((bblk, c, tn), lambda b, p, nt: (b, 0, nt)),  # x
            pl.BlockSpec((c, c), lambda b, p, nt: (0, 0)),             # Wq
            pl.BlockSpec((c, c), lambda b, p, nt: (0, 0)),             # Wk
            pl.BlockSpec((c, c), lambda b, p, nt: (0, 0)),             # Wv^T
            pl.BlockSpec((c, c), lambda b, p, nt: (0, 0)),             # Wproj
            pl.BlockSpec((c, 1), lambda b, p, nt: (0, 0)),             # bias
            pl.BlockSpec((c, c), lambda b, p, nt: (0, 0)),             # mask
        ],
        # Phase 0 never writes; park its (resident) output window on block
        # (b, 0, 0) so nothing is written back until phase 1 produces data.
        out_specs=pl.BlockSpec((bblk, c, tn), lambda b, p, nt: (b, 0, nt * p)),
        scratch_shapes=[pltpu.VMEM((bblk, c, c), jnp.float32),   # G accum
                        pltpu.VMEM((bblk, c, c), jnp.float32)],  # fused M
        compiler_params=pltpu.CompilerParams(
            dimension_semantics=("parallel", "arbitrary", "arbitrary"),
            # v6e/v5e (128 MiB VMEM) can raise this toward ~96 MiB together
            # with larger max_n_tile / max_batch_block; keep <=32 MiB for v7x.
            vmem_limit_bytes=vmem_limit_bytes),
    )(x_cn, wq, wk, wvt, wproj, bias_col, mask_bias)

    # (bs, c, n) -> (bs, c, h, w): free reshape.
    return out_cn.reshape(bs, c, h, w)


def channel_attention_ref(x, w_qkv, w_proj, b_proj, *, num_heads):
    """Pure-JAX f32 reference mirroring the PyTorch forward exactly."""
    bs, c, h, w = x.shape
    head_dim = c // num_heads
    scale = float(head_dim) ** (-0.5)
    xs = x.reshape(bs, c, h * w).transpose(0, 2, 1)                    # (B,N,C)
    qkv = xs @ w_qkv.T                                                 # (B,N,3C)
    B, N, _ = xs.shape
    qkv = qkv.reshape(B, N, 3, num_heads, head_dim).transpose(2, 0, 3, 1, 4)
    q, k, v = qkv[0], qkv[1], qkv[2]                                   # (B,H,N,d)
    k = k * scale
    attn = jnp.swapaxes(k, -1, -2) @ v                                 # (B,H,d,d)
    attn = jax.nn.softmax(attn, axis=-1)
    y = jnp.swapaxes(attn @ jnp.swapaxes(q, -1, -2), -1, -2)           # (B,H,N,d)
    y = jnp.swapaxes(y, 1, 2).reshape(B, N, c)
    y = y @ w_proj.T + b_proj
    return y.transpose(0, 2, 1).reshape(bs, c, h, w)


if __name__ == "__main__":
    key = jax.random.PRNGKey(0)
    bs, c, h, w = 2, 32, 16, 16      # N = H*W = 256 (lane-dense), head_dim = 4
    num_heads = 8

    k1, k2, k3, k4 = jax.random.split(key, 4)
    x = jax.random.normal(k1, (bs, c, h, w), dtype=jnp.float32)
    # Deterministic synthetic parameters (PyTorch nn.Linear conventions).
    w_qkv = jax.random.normal(k2, (3 * c, c), dtype=jnp.float32) * 0.05
    w_proj = jax.random.normal(k3, (c, c), dtype=jnp.float32) * 0.05
    b_proj = jax.random.normal(k4, (c,), dtype=jnp.float32) * 0.01

    # max_n_tile=128 so the 256-pixel demo exercises the two-tile G
    # accumulation + streaming-output path (grid = 2 x 2 x 2).
    out = channel_attention(x, w_qkv, w_proj, b_proj, num_heads=num_heads,
                            max_n_tile=128)
    out = jax.block_until_ready(out)

    ref = channel_attention_ref(x, w_qkv, w_proj, b_proj, num_heads=num_heads)
    # Tolerance covers bf16 MXU operands for the two big-N matmuls plus the
    # approximate EUP reciprocal in the softmax (everything else is f32).
    np.testing.assert_allclose(np.asarray(out), np.asarray(ref),
                               rtol=5e-2, atol=5e-3)
    print("KERNEL_OK")
</pallas_src>

<mosaic_0001>
module attributes {stable_mosaic.version = 11 : i64} {
  func.func @_channel_attention_kernel(%arg0: i32, %arg1: i32, %arg2: i32, %arg3: memref<1x32x128xf32, #tpu.memory_space<vmem>>, %arg4: memref<32x32xf32, #tpu.memory_space<vmem>>, %arg5: memref<32x32xf32, #tpu.memory_space<vmem>>, %arg6: memref<32x32xf32, #tpu.memory_space<vmem>>, %arg7: memref<32x32xf32, #tpu.memory_space<vmem>>, %arg8: memref<32x1xf32, #tpu.memory_space<vmem>>, %arg9: memref<32x32xf32, #tpu.memory_space<vmem>>, %arg10: memref<1x32x128xf32, #tpu.memory_space<vmem>>, %arg11: memref<1x32x32xf32, #tpu.memory_space<vmem>>, %arg12: memref<1x32x32xf32, #tpu.memory_space<vmem>>) attributes {dimension_semantics = [#tpu.dimension_semantics<parallel>, #tpu.dimension_semantics<arbitrary>, #tpu.dimension_semantics<arbitrary>], iteration_bounds = array<i64: 2, 2, 2>, scalar_prefetch = 0 : i64, scratch_operands = 2 : i64, tpu.core_type = #tpu.core_type<tc>, window_params = [{transform_indices = @transform_0, window_bounds = array<i64: 1, 32, 128>}, {pipeline_mode = #tpu.pipeline_mode<synchronous>, transform_indices = @transform_1, window_bounds = array<i64: 32, 32>}, {pipeline_mode = #tpu.pipeline_mode<synchronous>, transform_indices = @transform_2, window_bounds = array<i64: 32, 32>}, {pipeline_mode = #tpu.pipeline_mode<synchronous>, transform_indices = @transform_3, window_bounds = array<i64: 32, 32>}, {pipeline_mode = #tpu.pipeline_mode<synchronous>, transform_indices = @transform_4, window_bounds = array<i64: 32, 32>}, {pipeline_mode = #tpu.pipeline_mode<synchronous>, transform_indices = @transform_5, window_bounds = array<i64: 32, 1>}, {pipeline_mode = #tpu.pipeline_mode<synchronous>, transform_indices = @transform_6, window_bounds = array<i64: 32, 32>}, {transform_indices = @transform_7, window_bounds = array<i64: 1, 32, 128>}]} {
    %c0_i32 = arith.constant 0 : i32
    %0 = arith.cmpi eq, %arg1, %c0_i32 : i32
    %1 = arith.extui %0 : i1 to i32
    %c0_i32_0 = arith.constant 0 : i32
    %2 = arith.cmpi ne, %1, %c0_i32_0 : i32
    scf.if %2 {
      %c0_i32_2 = arith.constant 0 : i32
      %6 = arith.cmpi eq, %arg2, %c0_i32_2 : i32
      %7 = arith.extui %6 : i1 to i32
      %c0_i32_3 = arith.constant 0 : i32
      %8 = arith.cmpi ne, %7, %c0_i32_3 : i32
      scf.if %8 {
        %cst_14 = arith.constant 0.000000e+00 : f32
        %18 = vector.broadcast %cst_14 : f32 to vector<1x32x32xf32>
        %c0_15 = arith.constant 0 : index
        %c0_16 = arith.constant 0 : index
        %c0_17 = arith.constant 0 : index
        %19 = vector.load %arg11[%c0_15, %c0_16, %c0_17] : memref<1x32x32xf32, #tpu.memory_space<vmem>>, vector<1x32x32xf32>
        tpu.vector_store %arg11[%c0_15, %c0_16, %c0_17], %18 {strides = array<i32>} : memref<1x32x32xf32, #tpu.memory_space<vmem>>, vector<1x32x32xf32>,
      } else {
      }
      %c0 = arith.constant 0 : index
      %c0_4 = arith.constant 0 : index
      %c0_5 = arith.constant 0 : index
      %9 = vector.load %arg3[%c0, %c0_4, %c0_5] : memref<1x32x128xf32, #tpu.memory_space<vmem>>, vector<1x32x128xf32>
      %10 = arith.truncf %9 : vector<1x32x128xf32> to vector<1x32x128xbf16>
      %c0_6 = arith.constant 0 : index
      %c0_7 = arith.constant 0 : index
      %c0_8 = arith.constant 0 : index
      %11 = vector.load %arg11[%c0_6, %c0_7, %c0_8] : memref<1x32x32xf32, #tpu.memory_space<vmem>>, vector<1x32x32xf32>
      "tpu.trace_start"() <{level = 10 : i32, message = "bin,bjn->bij"}> : () -> ()
      %cst = arith.constant dense<0.000000e+00> : vector<1x32x32xf32>
      %12 = tpu.matmul %10, %10, %cst {dimension_numbers = #tpu.dot_dimension_numbers<[2], [2], [1], [1], [0, 0, 0, 1, 1, 1], [0], [0]>} : vector<1x32x128xbf16>, vector<1x32x128xbf16>, vector<1x32x32xf32> -> vector<1x32x32xf32>
      "tpu.trace_stop"() : () -> ()
      %13 = arith.addf %11, %12 : vector<1x32x32xf32>
      %c0_9 = arith.constant 0 : index
      %c0_10 = arith.constant 0 : index
      %c0_11 = arith.constant 0 : index
      %14 = vector.load %arg11[%c0_9, %c0_10, %c0_11] : memref<1x32x32xf32, #tpu.memory_space<vmem>>, vector<1x32x32xf32>
      tpu.vector_store %arg11[%c0_9, %c0_10, %c0_11], %13 {strides = array<i32>} : memref<1x32x32xf32, #tpu.memory_space<vmem>>, vector<1x32x32xf32>,
      %c1_i32_12 = arith.constant 1 : i32
      %15 = arith.cmpi eq, %arg2, %c1_i32_12 : i32
      %16 = arith.extui %15 : i1 to i32
      %c0_i32_13 = arith.constant 0 : i32
      %17 = arith.cmpi ne, %16, %c0_i32_13 : i32
      scf.if %17 {
        %c0_14 = arith.constant 0 : index
        %c0_15 = arith.constant 0 : index
        %18 = vector.load %arg4[%c0_14, %c0_15] : memref<32x32xf32, #tpu.memory_space<vmem>>, vector<32x32xf32>
        %c0_16 = arith.constant 0 : index
        %c0_17 = arith.constant 0 : index
        %19 = vector.load %arg5[%c0_16, %c0_17] : memref<32x32xf32, #tpu.memory_space<vmem>>, vector<32x32xf32>
        %c0_18 = arith.constant 0 : index
        %c0_19 = arith.constant 0 : index
        %20 = vector.load %arg6[%c0_18, %c0_19] : memref<32x32xf32, #tpu.memory_space<vmem>>, vector<32x32xf32>
        %c0_20 = arith.constant 0 : index
        %c0_21 = arith.constant 0 : index
        %21 = vector.load %arg7[%c0_20, %c0_21] : memref<32x32xf32, #tpu.memory_space<vmem>>, vector<32x32xf32>
        %c0_22 = arith.constant 0 : index
        %c0_23 = arith.constant 0 : index
        %22 = vector.load %arg9[%c0_22, %c0_23] : memref<32x32xf32, #tpu.memory_space<vmem>>, vector<32x32xf32>
        %c0_24 = arith.constant 0 : index
        %c0_25 = arith.constant 0 : index
        %c0_26 = arith.constant 0 : index
        %23 = vector.load %arg11[%c0_24, %c0_25, %c0_26] : memref<1x32x32xf32, #tpu.memory_space<vmem>>, vector<1x32x32xf32>
        %24 = vector.shape_cast %23 : vector<1x32x32xf32> to vector<32x32xf32>
        %cst_27 = arith.constant dense<0.000000e+00> : vector<32x32xf32>
        %25 = tpu.matmul %24, %20, %cst_27 {dimension_numbers = #tpu.dot_dimension_numbers<[1], [0], [0], [1], [0, 0, 1, 1], [], []>} : vector<32x32xf32>, vector<32x32xf32>, vector<32x32xf32> -> vector<32x32xf32>
        %cst_28 = arith.constant dense<0.000000e+00> : vector<32x32xf32>
        %26 = tpu.matmul %19, %25, %cst_28 {dimension_numbers = #tpu.dot_dimension_numbers<[1], [0], [0], [1], [0, 0, 1, 1], [], []>} : vector<32x32xf32>, vector<32x32xf32>, vector<32x32xf32> -> vector<32x32xf32>
        %cst_29 = arith.constant 5.000000e-01 : f32
        %27 = vector.broadcast %cst_29 : f32 to vector<32x32xf32>
        %28 = arith.mulf %26, %27 : vector<32x32xf32>
        %29 = arith.addf %28, %22 : vector<32x32xf32>
        %cst_30 = arith.constant dense<0xFF800000> : vector<32xf32>
        %30 = vector.multi_reduction <maximumf>, %29, %cst_30 [1] : vector<32x32xf32> to vector<32xf32>
        %31 = vector.shape_cast %30 : vector<32xf32> to vector<32x1xf32>
        %32 = vector.broadcast %31 : vector<32x1xf32> to vector<32x32xf32>
        %33 = arith.subf %29, %32 : vector<32x32xf32>
        %34 = math.exp %33 : vector<32x32xf32>
        %cst_31 = arith.constant dense<0.000000e+00> : vector<32xf32>
        %35 = vector.multi_reduction <add>, %34, %cst_31 [1] : vector<32x32xf32> to vector<32xf32>
        %36 = vector.shape_cast %35 : vector<32xf32> to vector<32x1xf32>
        %37 = tpu.reciprocal %36 {approx = true} : vector<32x1xf32> -> vector<32x1xf32>
        %38 = vector.broadcast %37 : vector<32x1xf32> to vector<32x32xf32>
        %39 = arith.mulf %34, %38 : vector<32x32xf32>
        %cst_32 = arith.constant dense<0.000000e+00> : vector<32x32xf32>
        %40 = tpu.matmul %39, %18, %cst_32 {dimension_numbers = #tpu.dot_dimension_numbers<[1], [0], [0], [1], [0, 0, 1, 1], [], []>} : vector<32x32xf32>, vector<32x32xf32>, vector<32x32xf32> -> vector<32x32xf32>
        %cst_33 = arith.constant dense<0.000000e+00> : vector<32x32xf32>
        %41 = tpu.matmul %21, %40, %cst_33 {dimension_numbers = #tpu.dot_dimension_numbers<[1], [0], [0], [1], [0, 0, 1, 1], [], []>} : vector<32x32xf32>, vector<32x32xf32>, vector<32x32xf32> -> vector<32x32xf32>
        %c0_34 = arith.constant 0 : index
        %c0_35 = arith.constant 0 : index
        %c0_36 = arith.constant 0 : index
        %42 = vector.load %arg12[%c0_34, %c0_35, %c0_36] : memref<1x32x32xf32, #tpu.memory_space<vmem>>, vector<1x32x32xf32>
        %43 = vector.shape_cast %42 : vector<1x32x32xf32> to vector<32x32xf32>
        %44 = vector.shape_cast %41 : vector<32x32xf32> to vector<1x32x32xf32>
        tpu.vector_store %arg12[%c0_34, %c0_35, %c0_36], %44 {strides = array<i32>} : memref<1x32x32xf32, #tpu.memory_space<vmem>>, vector<1x32x32xf32>,
      } else {
      }
    } else {
    }
    %c1_i32 = arith.constant 1 : i32
    %3 = arith.cmpi eq, %arg1, %c1_i32 : i32
    %4 = arith.extui %3 : i1 to i32
    %c0_i32_1 = arith.constant 0 : i32
    %5 = arith.cmpi ne, %4, %c0_i32_1 : i32
    scf.if %5 {
      %c0 = arith.constant 0 : index
      %c0_2 = arith.constant 0 : index
      %c0_3 = arith.constant 0 : index
      %6 = vector.load %arg3[%c0, %c0_2, %c0_3] : memref<1x32x128xf32, #tpu.memory_space<vmem>>, vector<1x32x128xf32>
      %7 = arith.truncf %6 : vector<1x32x128xf32> to vector<1x32x128xbf16>
      %c0_4 = arith.constant 0 : index
      %c0_5 = arith.constant 0 : index
      %c0_6 = arith.constant 0 : index
      %8 = vector.load %arg12[%c0_4, %c0_5, %c0_6] : memref<1x32x32xf32, #tpu.memory_space<vmem>>, vector<1x32x32xf32>
      %9 = arith.truncf %8 : vector<1x32x32xf32> to vector<1x32x32xbf16>
      "tpu.trace_start"() <{level = 10 : i32, message = "boc,bcn->bon"}> : () -> ()
      %cst = arith.constant dense<0.000000e+00> : vector<1x32x128xf32>
      %10 = tpu.matmul %9, %7, %cst {dimension_numbers = #tpu.dot_dimension_numbers<[2], [1], [1], [2], [0, 0, 0, 1, 1, 2], [0], [0]>} : vector<1x32x32xbf16>, vector<1x32x128xbf16>, vector<1x32x128xf32> -> vector<1x32x128xf32>
      "tpu.trace_stop"() : () -> ()
      %c0_7 = arith.constant 0 : index
      %c0_8 = arith.constant 0 : index
      %11 = vector.load %arg8[%c0_7, %c0_8] : memref<32x1xf32, #tpu.memory_space<vmem>>, vector<32x1xf32>
      %12 = vector.shape_cast %11 : vector<32x1xf32> to vector<1x32x1xf32>
      %13 = vector.broadcast %12 : vector<1x32x1xf32> to vector<1x32x128xf32>
      %14 = arith.addf %10, %13 : vector<1x32x128xf32>
      %c0_9 = arith.constant 0 : index
      %c0_10 = arith.constant 0 : index
      %c0_11 = arith.constant 0 : index
      %15 = vector.load %arg10[%c0_9, %c0_10, %c0_11] : memref<1x32x128xf32, #tpu.memory_space<vmem>>, vector<1x32x128xf32>
      tpu.vector_store %arg10[%c0_9, %c0_10, %c0_11], %14 {strides = array<i32>} : memref<1x32x128xf32, #tpu.memory_space<vmem>>, vector<1x32x128xf32>,
    } else {
    }
    return
  }
  func.func @transform_0(%arg0: i32, %arg1: i32, %arg2: i32) -> (i32, i32, i32) {
    %c0_i32 = arith.constant 0 : i32
    %c0_i32_0 = arith.constant 0 : i32
    return %arg0, %c0_i32, %arg2 : i32, i32, i32
  }
  func.func @transform_1(%arg0: i32, %arg1: i32, %arg2: i32) -> (i32, i32) {
    %c0_i32 = arith.constant 0 : i32
    %c0_i32_0 = arith.constant 0 : i32
    %c0_i32_1 = arith.constant 0 : i32
    return %c0_i32, %c0_i32_0 : i32, i32
  }
  func.func @transform_2(%arg0: i32, %arg1: i32, %arg2: i32) -> (i32, i32) {
    %c0_i32 = arith.constant 0 : i32
    %c0_i32_0 = arith.constant 0 : i32
    %c0_i32_1 = arith.constant 0 : i32
    return %c0_i32, %c0_i32_0 : i32, i32
  }
  func.func @transform_3(%arg0: i32, %arg1: i32, %arg2: i32) -> (i32, i32) {
    %c0_i32 = arith.constant 0 : i32
    %c0_i32_0 = arith.constant 0 : i32
    %c0_i32_1 = arith.constant 0 : i32
    return %c0_i32, %c0_i32_0 : i32, i32
  }
  func.func @transform_4(%arg0: i32, %arg1: i32, %arg2: i32) -> (i32, i32) {
    %c0_i32 = arith.constant 0 : i32
    %c0_i32_0 = arith.constant 0 : i32
    %c0_i32_1 = arith.constant 0 : i32
    return %c0_i32, %c0_i32_0 : i32, i32
  }
  func.func @transform_5(%arg0: i32, %arg1: i32, %arg2: i32) -> (i32, i32) {
    %c0_i32 = arith.constant 0 : i32
    %c0_i32_0 = arith.constant 0 : i32
    %c0_i32_1 = arith.constant 0 : i32
    return %c0_i32, %c0_i32_0 : i32, i32
  }
  func.func @transform_6(%arg0: i32, %arg1: i32, %arg2: i32) -> (i32, i32) {
    %c0_i32 = arith.constant 0 : i32
    %c0_i32_0 = arith.constant 0 : i32
    %c0_i32_1 = arith.constant 0 : i32
    return %c0_i32, %c0_i32_0 : i32, i32
  }
  func.func @transform_7(%arg0: i32, %arg1: i32, %arg2: i32) -> (i32, i32, i32) {
    %0 = arith.muli %arg2, %arg1 : i32
    %c0_i32 = arith.constant 0 : i32
    %c0_i32_0 = arith.constant 0 : i32
    return %arg0, %c0_i32, %0 : i32, i32, i32
  }
}

</mosaic_0001>

<llo_original>
// kernel: tpu_custom_call.1
$region0: #{tpu_custom_call.1}
  #allocation0 [shape = 'u32[]', space=smem, size = 0x4, offset = 0x4, fixed_abs, tag = 'smem constant byte address 0x4 - core index']
  #allocation1 [shape = 'u32[144,128]{1,0:T(1,128)}', space=vmem, size = 0x12000, scoped, tag = 'internal scratch']
  #allocation2 [shape = 'f32[1,32,32]{2,1,0:T(8,128)}', space=vmem, size = 0x4000, scoped, tag = 'scratch operand']
  #allocation3 [shape = 'f32[1,32,32]{2,1,0:T(8,128)}', space=vmem, size = 0x4000, scoped, tag = 'scratch operand']
  %s0 = inlined_call_operand.hbm [shape: f32[2,32,256], index: 0, kind: input, shape index: {}]
  %s1 = inlined_call_operand.vmem [shape: f32[32,32], index: 1, kind: input, shape index: {}]
  %s2 = inlined_call_operand.hbm [shape: f32[32,32], index: 2, kind: input, shape index: {}]
  %s3 = inlined_call_operand.hbm [shape: f32[32,32], index: 3, kind: input, shape index: {}]
  %s4 = inlined_call_operand.hbm [shape: f32[32,32], index: 4, kind: input, shape index: {}]
  %s5 = inlined_call_operand.vmem [shape: f32[32,1], index: 5, kind: input, shape index: {}]
  %s6 = inlined_call_operand.hbm [shape: f32[32,32], index: 6, kind: input, shape index: {}]
  %s7 = inlined_call_operand.hbm [shape: f32[2,32,256], index: 7, kind: output, shape index: {}]
  %s8 = sld [smem:[#allocation0]]
  $region97: #{tpu_custom_call.1} parent=0
    _
  %s10 = ssub.s32 1, %s8
  %s11 = scalar_select 0, %s10, %s8
  $region1: #{tpu_custom_call.1} parent=0
    #allocation4 [shape = 'u8[32768]{0}', space=vmem, size = 0x8000, scoped, tag = 'input window, operand 0']
    #allocation5 [shape = 's32[2]{0}', space=sflag, size = 0x8, scoped, tag = 'scoped memory for tpu_custom_call.1']
    #allocation6 [shape = 's32[2]{0}', space=sflag, size = 0x8, scoped, tag = 'scoped memory for tpu_custom_call.1']
    #allocation7 [shape = 'u8[16384]{0}', space=vmem, size = 0x4000, scoped, tag = 'input window, operand 2, single buffered']
    #allocation8 [shape = 's32[1]{0}', space=sflag, size = 0x4, scoped, tag = 'scoped memory for tpu_custom_call.1']
    #allocation9 [shape = 'u8[16384]{0}', space=vmem, size = 0x4000, scoped, tag = 'input window, operand 3, single buffered']
    #allocation10 [shape = 'u8[16384]{0}', space=vmem, size = 0x4000, scoped, tag = 'input window, operand 4, single buffered']
    #allocation11 [shape = 's32[1]{0}', space=sflag, size = 0x4, scoped, tag = 'scoped memory for tpu_custom_call.1']
    #allocation12 [shape = 'u8[16384]{0}', space=vmem, size = 0x4000, scoped, tag = 'input window, operand 6, single buffered']
    #allocation13 [shape = 'u8[32768]{0}', space=vmem, size = 0x8000, scoped, tag = 'output window, operand 0']
    %12 = vsyncpa [#allocation5], 0
    %s13 = scalar_lea.sflag [#allocation5], 1
    %14 = vsyncpa %s13, 0
    %15 = vsyncpa [#allocation8], 0
    %16 = vsyncpa [#allocation11], 0
    %17 = vsyncpa [#allocation6], 0
    %s18 = scalar_lea.sflag [#allocation6], 1
    %19 = vsyncpa %s18, 0
    loop: start=0, step=1, limit=10
    $region2: #{tpu_custom_call.1} parent=1 // loop_pre_header
      _
    $region3: #{tpu_custom_call.1} parent=1 // loop_header
      %s21 = sphi 0, %s25
      %p22 = scmp.ge.s32.totalorder %s21, 10
      %s28 = sphi 0, %s47
      %s29 = sphi 0, %s43
      %s30 = sphi 0, %s39
      %s31 = sphi 0, %s28
      %s32 = sphi 0, %s29
      %s33 = sphi 0, %s30
      %s34 = sphi 0, %s31
      %s35 = sphi 0, %s32
      %s36 = sphi 0, %s33
      %s52 = sphi 0, %s54
      %s55 = sphi 0, %s52
      %s56 = sphi 0, %s55
      %s72 = sphi 0, %s56
      %s76 = sphi 0, %s76
      %s78 = sphi 0, %s76
      %s79 = sphi 0, %s78
      %s93 = sphi 0, %s79
      %s97 = sphi 0, %s97
      %s99 = sphi 0, %s97
      %s100 = sphi 0, %s99
      %s114 = sphi 0, %s100
      %s118 = sphi 0, %s118
      %s120 = sphi 0, %s118
      %s121 = sphi 0, %s120
      %s135 = sphi 0, %s121
      %s139 = sphi 0, %s139
      %s141 = sphi 0, %s139
      %s142 = sphi 0, %s141
      %s156 = sphi 0, %s142
      %s160 = sphi 0, %s160
      %s162 = sphi 0, %s160
      %s163 = sphi 0, %s162
      %s177 = sphi 0, %s163
      %s181 = sphi 0, %s181
      %s183 = sphi 0, %s181
      %s184 = sphi 0, %s183
      %s198 = sphi 0, %s184
      %s208 = sphi 0, %s210
      %s211 = sphi 0, %s208
      %s212 = sphi 0, %s211
      %s228 = sphi 0, %s212
    $region4: #{tpu_custom_call.1} parent=1 // loop_header_branch
      %24 = sbr.rel (%p22) target = $region8
    $region5: #{tpu_custom_call.1} parent=1 // loop_body
      %s26 = ssub.s32 %s21, 1
      %s27 = ssub.s32 %s21, 2
      %s37 = sadd.s32 1, %s30
      %p38 = scmp.ge.s32.totalorder %s37, 2
      %s39 = scalar_select %p38, 0, %s37
      %s40 = sadd.s32 1, %s29
      %s41 = scalar_select %p38, %s40, %s29
      %p42 = scmp.ge.s32.totalorder %s41, 2
      %s43 = scalar_select %p42, 0, %s41
      %s44 = sadd.s32 1, %s28
      %s45 = scalar_select %p42, %s44, %s28
      %p46 = scmp.ge.s32.totalorder %s45, 2
      %s47 = scalar_select %p46, 0, %s45
      %s48 = ssub.s32 %s28, %s47
      %s49 = ssub.s32 %s30, %s39
      %s50 = sor.u32 %s48, %s49
      %p51 = scmp.eq.s32.totalorder %s50, 0
      %s53 = sadd.s32 %s52, 1
      %s54 = scalar_select %p51, %s52, %s53
      %p57 = pneg %p51
      %p58 = scmp.eq.s32.totalorder %s21, 7
      %p59 = por %p57, %p58
      %p60 = scmp.ne.s32.totalorder %s52, %s55
      %p61 = scmp.eq.s32.totalorder %s21, 0
      %p62 = por %p60, %p61
      %p63 = scmp.ne.s32.totalorder %s52, %s55
      %p64 = scmp.eq.s32.totalorder %s26, 7
      %p65 = por %p63, %p64
      %p66 = scmp.ne.s32.totalorder %s55, %s56
      %p67 = scmp.eq.s32.totalorder %s26, 0
      %p68 = por %p66, %p67
      %p69 = scmp.ne.s32.totalorder %s55, %s56
      %p70 = scmp.eq.s32.totalorder %s27, 7
      %p71 = por %p69, %p70
      %p73 = scmp.ne.s32.totalorder %s56, %s72
      %p74 = scmp.eq.s32.totalorder %s27, 0
      %p75 = por %p73, %p74
      %s77 = sadd.s32 %s76, 1
      %p80 = scmp.eq.s32.totalorder %s21, 7
      %p81 = scmp.ne.s32.totalorder %s76, %s78
      %p82 = scmp.eq.s32.totalorder %s21, 0
      %p83 = por %p81, %p82
      %p84 = scmp.ne.s32.totalorder %s76, %s78
      %p85 = scmp.eq.s32.totalorder %s26, 7
      %p86 = por %p84, %p85
      %p87 = scmp.ne.s32.totalorder %s78, %s79
      %p88 = scmp.eq.s32.totalorder %s26, 0
      %p89 = por %p87, %p88
      %p90 = scmp.ne.s32.totalorder %s78, %s79
      %p91 = scmp.eq.s32.totalorder %s27, 7
      %p92 = por %p90, %p91
      %p94 = scmp.ne.s32.totalorder %s79, %s93
      %p95 = scmp.eq.s32.totalorder %s27, 0
      %p96 = por %p94, %p95
      %s98 = sadd.s32 %s97, 1
      %p101 = scmp.eq.s32.totalorder %s21, 7
      %p102 = scmp.ne.s32.totalorder %s97, %s99
      %p103 = scmp.eq.s32.totalorder %s21, 0
      %p104 = por %p102, %p103
      %p105 = scmp.ne.s32.totalorder %s97, %s99
      %p106 = scmp.eq.s32.totalorder %s26, 7
      %p107 = por %p105, %p106
      %p108 = scmp.ne.s32.totalorder %s99, %s100
      %p109 = scmp.eq.s32.totalorder %s26, 0
      %p110 = por %p108, %p109
      %p111 = scmp.ne.s32.totalorder %s99, %s100
      %p112 = scmp.eq.s32.totalorder %s27, 7
      %p113 = por %p111, %p112
      %p115 = scmp.ne.s32.totalorder %s100, %s114
      %p116 = scmp.eq.s32.totalorder %s27, 0
      %p117 = por %p115, %p116
      %s119 = sadd.s32 %s118, 1
      %p122 = scmp.eq.s32.totalorder %s21, 7
      %p123 = scmp.ne.s32.totalorder %s118, %s120
      %p124 = scmp.eq.s32.totalorder %s21, 0
      %p125 = por %p123, %p124
      %p126 = scmp.ne.s32.totalorder %s118, %s120
      %p127 = scmp.eq.s32.totalorder %s26, 7
      %p128 = por %p126, %p127
      %p129 = scmp.ne.s32.totalorder %s120, %s121
      %p130 = scmp.eq.s32.totalorder %s26, 0
      %p131 = por %p129, %p130
      %p132 = scmp.ne.s32.totalorder %s120, %s121
      %p133 = scmp.eq.s32.totalorder %s27, 7
      %p134 = por %p132, %p133
      %p136 = scmp.ne.s32.totalorder %s121, %s135
      %p137 = scmp.eq.s32.totalorder %s27, 0
      %p138 = por %p136, %p137
      %s140 = sadd.s32 %s139, 1
      %p143 = scmp.eq.s32.totalorder %s21, 7
      %p144 = scmp.ne.s32.totalorder %s139, %s141
      %p145 = scmp.eq.s32.totalorder %s21, 0
      %p146 = por %p144, %p145
      %p147 = scmp.ne.s32.totalorder %s139, %s141
      %p148 = scmp.eq.s32.totalorder %s26, 7
      %p149 = por %p147, %p148
      %p150 = scmp.ne.s32.totalorder %s141, %s142
      %p151 = scmp.eq.s32.totalorder %s26, 0
      %p152 = por %p150, %p151
      %p153 = scmp.ne.s32.totalorder %s141, %s142
      %p154 = scmp.eq.s32.totalorder %s27, 7
      %p155 = por %p153, %p154
      %p157 = scmp.ne.s32.totalorder %s142, %s156
      %p158 = scmp.eq.s32.totalorder %s27, 0
      %p159 = por %p157, %p158
      %s161 = sadd.s32 %s160, 1
      %p164 = scmp.eq.s32.totalorder %s21, 7
      %p165 = scmp.ne.s32.totalorder %s160, %s162
      %p166 = scmp.eq.s32.totalorder %s21, 0
      %p167 = por %p165, %p166
      %p168 = scmp.ne.s32.totalorder %s160, %s162
      %p169 = scmp.eq.s32.totalorder %s26, 7
      %p170 = por %p168, %p169
      %p171 = scmp.ne.s32.totalorder %s162, %s163
      %p172 = scmp.eq.s32.totalorder %s26, 0
      %p173 = por %p171, %p172
      %p174 = scmp.ne.s32.totalorder %s162, %s163
      %p175 = scmp.eq.s32.totalorder %s27, 7
      %p176 = por %p174, %p175
      %p178 = scmp.ne.s32.totalorder %s163, %s177
      %p179 = scmp.eq.s32.totalorder %s27, 0
      %p180 = por %p178, %p179
      %s182 = sadd.s32 %s181, 1
      %p185 = scmp.eq.s32.totalorder %s21, 7
      %p186 = scmp.ne.s32.totalorder %s181, %s183
      %p187 = scmp.eq.s32.totalorder %s21, 0
      %p188 = por %p186, %p187
      %p189 = scmp.ne.s32.totalorder %s181, %s183
      %p190 = scmp.eq.s32.totalorder %s26, 7
      %p191 = por %p189, %p190
      %p192 = scmp.ne.s32.totalorder %s183, %s184
      %p193 = scmp.eq.s32.totalorder %s26, 0
      %p194 = por %p192, %p193
      %p195 = scmp.ne.s32.totalorder %s183, %s184
      %p196 = scmp.eq.s32.totalorder %s27, 7
      %p197 = por %p195, %p196
      %p199 = scmp.ne.s32.totalorder %s184, %s198
      %p200 = scmp.eq.s32.totalorder %s27, 0
      %p201 = por %p199, %p200
      %s202 = smul.u32 %s30, %s29
      %s203 = smul.u32 %s39, %s43
      %s204 = ssub.s32 %s28, %s47
      %s205 = ssub.s32 %s202, %s203
      %s206 = sor.u32 %s204, %s205
      %p207 = scmp.eq.s32.totalorder %s206, 0
      %s209 = sadd.s32 %s208, 1
      %s210 = scalar_select %p207, %s208, %s209
      %p213 = pneg %p207
      %p214 = scmp.eq.s32.totalorder %s21, 7
      %p215 = por %p213, %p214
      %p216 = scmp.ne.s32.totalorder %s208, %s211
      %p217 = scmp.eq.s32.totalorder %s21, 0
      %p218 = por %p216, %p217
      %p219 = scmp.ne.s32.totalorder %s208, %s211
      %p220 = scmp.eq.s32.totalorder %s26, 7
      %p221 = por %p219, %p220
      %p222 = scmp.ne.s32.totalorder %s211, %s212
      %p223 = scmp.eq.s32.totalorder %s26, 0
      %p224 = por %p222, %p223
      %p225 = scmp.ne.s32.totalorder %s211, %s212
      %p226 = scmp.eq.s32.totalorder %s27, 7
      %p227 = por %p225, %p226
      %p229 = scmp.ne.s32.totalorder %s212, %s228
      %p230 = scmp.eq.s32.totalorder %s27, 0
      %p231 = por %p229, %p230
      %p232 = scmp.le.s32.totalorder 1, %s21
      %p233 = scmp.lt.s32.totalorder %s21, 9
      %p234 = pnand %p232, %p233
      %p235 = pneg %p234
      // Predicated region
      $region9: #{tpu_custom_call.1} parent=5 // pred_check
        _
      $region10: #{tpu_custom_call.1} parent=5 // pred_check_branch
        %237 = sbr.rel (%p234) target = $region12
      $region11: #{tpu_custom_call.1} parent=5 // pred_region
        %s238 = ssub.s32 %s21, 1
        // Predicated region
        $region13: #{tpu_custom_call.1} parent=11 // pred_check
          %p239 = pneg %p89
        $region14: #{tpu_custom_call.1} parent=11 // pred_check_branch
          %241 = sbr.rel (%p239) target = $region16
        $region15: #{tpu_custom_call.1} parent=11 // pred_region
          _
        $region16: #{tpu_custom_call.1} parent=11 // pred_fallthru
          _
        // Predicated region
        $region17: #{tpu_custom_call.1} parent=11 // pred_check
          %p242 = pneg %p110
        $region18: #{tpu_custom_call.1} parent=11 // pred_check_branch
          %244 = sbr.rel (%p242) target = $region20
        $region19: #{tpu_custom_call.1} parent=11 // pred_region
          %s246 = ssub.s32 512, 512
          %247 = vsyncadd [#allocation8], %s246
          %s248 = sshll.u32 [#allocation7], 4
          %s249 = int_to_ptr.vmem [resolvable:$true] %s248
          %254 = dma.hbm_to_vmem [thread:$0]  %s2, 512, %s249, [#allocation8], 128, 128, 8
        $region20: #{tpu_custom_call.1} parent=11 // pred_fallthru
          _
        // Predicated region
        $region21: #{tpu_custom_call.1} parent=11 // pred_check
          %p255 = pneg %p131
        $region22: #{tpu_custom_call.1} parent=11 // pred_check_branch
          %257 = sbr.rel (%p255) target = $region24
        $region23: #{tpu_custom_call.1} parent=11 // pred_region
          %s259 = ssub.s32 512, 512
          %260 = vsyncadd [#allocation8], %s259
          %s261 = sshll.u32 [#allocation9], 4
          %s262 = int_to_ptr.vmem [resolvable:$true] %s261
          %267 = dma.hbm_to_vmem [thread:$0]  %s3, 512, %s262, [#allocation8], 128, 128, 8
        $region24: #{tpu_custom_call.1} parent=11 // pred_fallthru
          _
        // Predicated region
        $region25: #{tpu_custom_call.1} parent=11 // pred_check
          %p268 = pneg %p152
        $region26: #{tpu_custom_call.1} parent=11 // pred_check_branch
          %270 = sbr.rel (%p268) target = $region28
        $region27: #{tpu_custom_call.1} parent=11 // pred_region
          %s272 = ssub.s32 512, 512
          %273 = vsyncadd [#allocation11], %s272
          %s274 = sshll.u32 [#allocation10], 4
          %s275 = int_to_ptr.vmem [resolvable:$true] %s274
          %280 = dma.hbm_to_vmem [thread:$0]  %s4, 512, %s275, [#allocation11], 128, 128, 8
        $region28: #{tpu_custom_call.1} parent=11 // pred_fallthru
          _
        // Predicated region
        $region29: #{tpu_custom_call.1} parent=11 // pred_check
          %p281 = pneg %p173
        $region30: #{tpu_custom_call.1} parent=11 // pred_check_branch
          %283 = sbr.rel (%p281) target = $region32
        $region31: #{tpu_custom_call.1} parent=11 // pred_region
          _
        $region32: #{tpu_custom_call.1} parent=11 // pred_fallthru
          _
        // Predicated region
        $region33: #{tpu_custom_call.1} parent=11 // pred_check
          %p284 = pneg %p194
        $region34: #{tpu_custom_call.1} parent=11 // pred_check_branch
          %286 = sbr.rel (%p284) target = $region36
        $region35: #{tpu_custom_call.1} parent=11 // pred_region
          %s288 = ssub.s32 512, 512
          %289 = vsyncadd [#allocation11], %s288
          %s290 = sshll.u32 [#allocation12], 4
          %s291 = int_to_ptr.vmem [resolvable:$true] %s290
          %296 = dma.hbm_to_vmem [thread:$0]  %s6, 512, %s291, [#allocation11], 128, 128, 8
        $region36: #{tpu_custom_call.1} parent=11 // pred_fallthru
          _
      $region12: #{tpu_custom_call.1} parent=5 // pred_fallthru
        _
      %p297 = scmp.lt.s32.totalorder %s21, 8
      // Predicated region
      $region37: #{tpu_custom_call.1} parent=5 // pred_check
        %p298 = pneg %p297
      $region38: #{tpu_custom_call.1} parent=5 // pred_check_branch
        %300 = sbr.rel (%p298) target = $region40
      $region39: #{tpu_custom_call.1} parent=5 // pred_region
        // Predicated region
        $region41: #{tpu_custom_call.1} parent=39 // pred_check
          %p301 = pneg %p62
        $region42: #{tpu_custom_call.1} parent=39 // pred_check_branch
          %303 = sbr.rel (%p301) target = $region44
        $region43: #{tpu_custom_call.1} parent=39 // pred_region
          %s304 = sand.u32 %s52, 1
          %s305 = scalar_lea.sflag [#allocation5], %s304
          %s306 = sand.u32 %s52, 1
          %s307 = smul.addr %s306, 32
          %s308 = scalar_lea.vmem [#allocation4], %s307
          %s310 = ssub.s32 512, 512
          %311 = vsyncadd %s305, %s310
          %s312 = smul.addr %s28, 8
          %s313 = sadd.s32 %s30, %s312
          %s314 = smul.addr %s313, 128
          %s315 = scalar_lea.hbm %s0, %s314
          %s316 = sshll.u32 %s308, 4
          %s317 = int_to_ptr.vmem [resolvable:$true] %s316
          %322 = dma.hbm_to_vmem [thread:$0]  %s315, 512, %s317, %s305, 256, 128, 8
        $region44: #{tpu_custom_call.1} parent=39 // pred_fallthru
          _
      $region40: #{tpu_custom_call.1} parent=5 // pred_fallthru
        _
      %p323 = scmp.le.s32.totalorder 1, %s21
      %p324 = scmp.lt.s32.totalorder %s21, 9
      %p325 = pnand %p323, %p324
      %p326 = pneg %p325
      // Predicated region
      $region45: #{tpu_custom_call.1} parent=5 // pred_check
        _
      $region46: #{tpu_custom_call.1} parent=5 // pred_check_branch
        %328 = sbr.rel (%p325) target = $region48
      $region47: #{tpu_custom_call.1} parent=5 // pred_region
        %s329 = ssub.s32 %s21, 1
        %s330 = sand.u32 %s55, 1
        %s331 = scalar_lea.sflag [#allocation5], %s330
        %s332 = sand.u32 %s55, 1
        %s333 = smul.addr %s332, 32
        %s334 = scalar_lea.vmem [#allocation4], %s333
        // Predicated region
        $region49: #{tpu_custom_call.1} parent=47 // pred_check
          %p335 = pneg %p68
        $region50: #{tpu_custom_call.1} parent=47 // pred_check_branch
          %337 = sbr.rel (%p335) target = $region52
        $region51: #{tpu_custom_call.1} parent=47 // pred_region
          %338 = dma.done %s331, 512
        $region52: #{tpu_custom_call.1} parent=47 // pred_fallthru
          _
        // Predicated region
        $region53: #{tpu_custom_call.1} parent=47 // pred_check
          %p339 = pneg %p110
        $region54: #{tpu_custom_call.1} parent=47 // pred_check_branch
          %341 = sbr.rel (%p339) target = $region56
        $region55: #{tpu_custom_call.1} parent=47 // pred_region
          %342 = dma.done [#allocation8], 512
        $region56: #{tpu_custom_call.1} parent=47 // pred_fallthru
          _
        // Predicated region
        $region57: #{tpu_custom_call.1} parent=47 // pred_check
          %p343 = pneg %p131
        $region58: #{tpu_custom_call.1} parent=47 // pred_check_branch
          %345 = sbr.rel (%p343) target = $region60
        $region59: #{tpu_custom_call.1} parent=47 // pred_region
          %346 = dma.done [#allocation8], 512
        $region60: #{tpu_custom_call.1} parent=47 // pred_fallthru
          _
        // Predicated region
        $region61: #{tpu_custom_call.1} parent=47 // pred_check
          %p347 = pneg %p152
        $region62: #{tpu_custom_call.1} parent=47 // pred_check_branch
          %349 = sbr.rel (%p347) target = $region64
        $region63: #{tpu_custom_call.1} parent=47 // pred_region
          %350 = dma.done [#allocation11], 512
        $region64: #{tpu_custom_call.1} parent=47 // pred_fallthru
          _
        // Predicated region
        $region65: #{tpu_custom_call.1} parent=47 // pred_check
          %p351 = pneg %p194
        $region66: #{tpu_custom_call.1} parent=47 // pred_check_branch
          %353 = sbr.rel (%p351) target = $region68
        $region67: #{tpu_custom_call.1} parent=47 // pred_region
          %354 = dma.done [#allocation11], 512
        $region68: #{tpu_custom_call.1} parent=47 // pred_fallthru
          _
        %s355 = sand.u32 %s55, 1
        %s356 = scalar_lea.sflag [#allocation5], %s355
        %s357 = sand.u32 %s55, 1
        %s358 = smul.addr %s357, 32
        %s359 = scalar_lea.vmem [#allocation4], %s358
        %p360 = pneg %p68
        %p361 = pneg %p65
        %p362 = pneg %p89
        %p363 = pneg %p86
        %p364 = pneg %p110
        %p365 = pneg %p107
        %p366 = pneg %p131
        %p367 = pneg %p128
        %p368 = pneg %p152
        %p369 = pneg %p149
        %p370 = pneg %p173
        %p371 = pneg %p170
        %p372 = pneg %p194
        %p373 = pneg %p191
        %p374 = pneg %p224
        %p375 = pneg %p221
        %s376 = sand.u32 %s211, 1
        %s377 = scalar_lea.sflag [#allocation6], %s376
        %s378 = sand.u32 %s211, 1
        %s379 = smul.addr %s378, 32
        %s380 = scalar_lea.vmem [#allocation13], %s379
        %s381 = smul.u32 %s33, %s32
        %p383 = scmp.eq.s32.totalorder %s32, 0
        // Predicated region
        $region69: #{tpu_custom_call.1} parent=47 // pred_check
          %p384 = pneg %p383
        $region70: #{tpu_custom_call.1} parent=47 // pred_check_branch
          %386 = sbr.rel (%p384) target = $region72
        $region71: #{tpu_custom_call.1} parent=47 // pred_region
          %p387 = scmp.eq.s32.totalorder %s33, 0
          // Predicated region
          $region73: #{tpu_custom_call.1} parent=71 // pred_check
            %p388 = pneg %p387
          $region74: #{tpu_custom_call.1} parent=71 // pred_check_branch
            %390 = sbr.rel (%p388) target = $region76
          $region75: #{tpu_custom_call.1} parent=71 // pred_region
            %vm391 = vcmask 261120
            %392 = vst.msk [vmem:[#allocation2] sm:$0xff] %vm391, 0.0
            %393 = vst.msk [vmem:[#allocation2 + $0x8] sm:$0xff] %vm391, 0.0
            %394 = vst.msk [vmem:[#allocation2 + $0x10] sm:$0xff] %vm391, 0.0
            %395 = vst.msk [vmem:[#allocation2 + $0x18] sm:$0xff] %vm391, 0.0
          $region76: #{tpu_custom_call.1} parent=71 // pred_fallthru
            _
          %v396 = vld [vmem:[%s334] sm:$0xff]
          %v397 = vld [vmem:[%s334 + $0x8] sm:$0xff]
          %v398 = vld [vmem:[%s334 + $0x10] sm:$0xff]
          %v399 = vld [vmem:[%s334 + $0x18] sm:$0xff]
          %v400 = vpack.c.bf16 %v397, %v396
          %v401 = vpack.c.bf16 %v399, %v398
          %v402 = vld [vmem:[#allocation2] sm:$0xff]
          %v403 = vld [vmem:[#allocation2 + $0x8] sm:$0xff]
          %v404 = vld [vmem:[#allocation2 + $0x10] sm:$0xff]
          %v405 = vld [vmem:[#allocation2 + $0x18] sm:$0xff]
          %406 = vmatprep.subr.bf16.mxu0 0
          %407 = vmatpush1.bf16.xpose.msra.mxu0 0
          %408 = vmatprep.subr.bf16.mxu0 0
          %409 = vmatpush1.bf16.xpose.msra.mxu0 0
          %410 = vmatprep.subr.bf16.mxu0 0
          %411 = vmatpush1.bf16.xpose.msra.mxu0 0
          %412 = vmatprep.subr.bf16.mxu0 0
          %413 = vmatpush1.bf16.xpose.msra.mxu0 0
          %414 = vmatprep.subr.bf16.mxu0 0
          %415 = vmatpush1.bf16.xpose.msra.mxu0 0
          %416 = vmatprep.subr.bf16.mxu0 0
          %417 = vmatpush1.bf16.xpose.msra.mxu0 0
          %418 = vmatprep.subr.bf16.mxu0 0
          %419 = vmatpush1.bf16.xpose.msra.mxu0 %v401
          %420 = vmatprep.subr.bf16.mxu0 0
          %421 = vmatpush1.bf16.xpose.msra.mxu0 %v400
          %422 = vmatprep.subr.bf16.mxu0 0
          %423 = vmatpush2.bf16.xpose.msra.mxu0 0
          %424 = vmatprep.subr.bf16.mxu0 0
          %425 = vmatpush2.bf16.xpose.msra.mxu0 0
          %426 = vmatprep.subr.bf16.mxu0 0
          %427 = vmatpush2.bf16.xpose.msra.mxu0 0
          %428 = vmatprep.subr.bf16.mxu0 0
          %429 = vmatpush2.bf16.xpose.msra.mxu0 0
          %430 = vmatprep.subr.bf16.mxu0 0
          %431 = vmatpush2.bf16.xpose.msra.mxu0 0
          %432 = vmatprep.subr.bf16.mxu0 0
          %433 = vmatpush2.bf16.xpose.msra.mxu0 0
          %434 = vmatprep.subr.bf16.mxu0 0
          %435 = vmatpush2.bf16.xpose.msra.mxu0 0
          %436 = vmatprep.subr.bf16.mxu0 0
          %437 = vmatpush2.bf16.xpose.msra.mxu0 0
          %438 = vmatprep.mubr.bf16.mxu0 0
          %439 = vmatmul.mubr.bf16.gmra.mxu0 %v400
          %v440 = vpop.f32.mrf.mxu0
          %v441 = vadd.f32 0.0, %v440
          %v442 = vpop.f32.mrf.mxu0
          %v443 = vpop.f32.mrf.mxu0
          %v444 = vadd.f32 0.0, %v443
          %v445 = vpop.f32.mrf.mxu0
          %446 = vmatprep.mubr.bf16.mxu0 0
          %447 = vmatmul.mubr.bf16.gmra.mxu0 %v401
          %v448 = vpop.f32.mrf.mxu0
          %v449 = vadd.f32 0.0, %v448
          %v450 = vpop.f32.mrf.mxu0
          %v451 = vpop.f32.mrf.mxu0
          %v452 = vadd.f32 0.0, %v451
          %v453 = vpop.f32.mrf.mxu0
          %454 = vdwg.mxu0
          %v455 = vadd.f32 %v402, %v441
          %v456 = vadd.f32 %v403, %v444
          %v457 = vadd.f32 %v404, %v449
          %v458 = vadd.f32 %v405, %v452
          %vm459 = vcmask 261120
          %460 = vst.msk [vmem:[#allocation2] sm:$0xff] %vm459, %v455
          %461 = vst.msk [vmem:[#allocation2 + $0x8] sm:$0xff] %vm459, %v456
          %462 = vst.msk [vmem:[#allocation2 + $0x10] sm:$0xff] %vm459, %v457
          %463 = vst.msk [vmem:[#allocation2 + $0x18] sm:$0xff] %vm459, %v458
          %p464 = scmp.eq.s32.totalorder %s33, 1
          // Predicated region
          $region77: #{tpu_custom_call.1} parent=71 // pred_check
            %p465 = pneg %p464
          $region78: #{tpu_custom_call.1} parent=71 // pred_check_branch
            %467 = sbr.rel (%p465) target = $region80
          $region79: #{tpu_custom_call.1} parent=71 // pred_region
            %v468 = vld [vmem:[%s1] sm:$0xff]
            %v469 = vld [vmem:[%s1 + $0x8] sm:$0xff]
            %v470 = vld [vmem:[%s1 + $0x10] sm:$0xff]
            %v471 = vld [vmem:[%s1 + $0x18] sm:$0xff]
            %v472 = vld [vmem:[#allocation7] sm:$0xff]
            %v473 = vld [vmem:[#allocation7 + $0x8] sm:$0xff]
            %v474 = vld [vmem:[#allocation7 + $0x10] sm:$0xff]
            %v475 = vld [vmem:[#allocation7 + $0x18] sm:$0xff]
            %v476 = vld [vmem:[#allocation9] sm:$0xff]
            %v477 = vld [vmem:[#allocation9 + $0x8] sm:$0xff]
            %v478 = vld [vmem:[#allocation9 + $0x10] sm:$0xff]
            %v479 = vld [vmem:[#allocation9 + $0x18] sm:$0xff]
            %v480 = vld [vmem:[#allocation10] sm:$0xff]
            %v481 = vld [vmem:[#allocation10 + $0x8] sm:$0xff]
            %v482 = vld [vmem:[#allocation10 + $0x10] sm:$0xff]
            %v483 = vld [vmem:[#allocation10 + $0x18] sm:$0xff]
            %v484 = vld [vmem:[#allocation12] sm:$0xff]
            %v485 = vld [vmem:[#allocation12 + $0x8] sm:$0xff]
            %v486 = vld [vmem:[#allocation12 + $0x10] sm:$0xff]
            %v487 = vld [vmem:[#allocation12 + $0x18] sm:$0xff]
            %v488 = vld [vmem:[#allocation2] sm:$0xff]
            %v489 = vld [vmem:[#allocation2 + $0x8] sm:$0xff]
            %v490 = vld [vmem:[#allocation2 + $0x10] sm:$0xff]
            %v491 = vld [vmem:[#allocation2 + $0x18] sm:$0xff]
            %v493 = vsel %vm459, %v488, 0
            %v496 = vsel %vm459, %v489, 0
            %v499 = vsel %vm459, %v490, 0
            %v502 = vsel %vm459, %v491, 0
            %504 = vmatprep.subr.mxu0 0.0
            %505 = vmatpush1.msra.mxu0 0.0
            %506 = vmatprep.subr.mxu0 0.0
            %507 = vmatpush1.msra.mxu0 0.0
            %508 = vmatprep.subr.mxu0 0.0
            %509 = vmatpush1.msra.mxu0 0.0
            %510 = vmatprep.subr.mxu0 0.0
            %511 = vmatpush1.msra.mxu0 0.0
            %512 = vmatprep.subr.mxu0 0.0
            %513 = vmatpush1.msra.mxu0 0.0
            %514 = vmatprep.subr.mxu0 0.0
            %515 = vmatpush1.msra.mxu0 0.0
            %516 = vmatprep.subr.mxu0 0.0
            %517 = vmatpush1.msra.mxu0 0.0
            %518 = vmatprep.subr.mxu0 0.0
            %519 = vmatpush1.msra.mxu0 0.0
            %520 = vmatprep.subr.mxu0 0.0
            %521 = vmatpush1.msra.mxu0 0.0
            %522 = vmatprep.subr.mxu0 0.0
            %523 = vmatpush1.msra.mxu0 0.0
            %524 = vmatprep.subr.mxu0 0.0
            %525 = vmatpush1.msra.mxu0 0.0
            %526 = vmatprep.subr.mxu0 0.0
            %527 = vmatpush1.msra.mxu0 0.0
            %528 = vmatprep.subr.mxu0 0.0
            %529 = vmatpush1.msra.mxu0 %v479
            %530 = vmatprep.subr.mxu0 0.0
            %531 = vmatpush1.msra.mxu0 %v478
            %532 = vmatprep.subr.mxu0 0.0
            %533 = vmatpush1.msra.mxu0 %v477
            %534 = vmatprep.subr.mxu0 0.0
            %535 = vmatpush1.msra.mxu0 %v476
            %536 = vmatprep.subr.mxu0 0.0
            %537 = vmatpush2.msra.mxu0 0.0
            %538 = vmatprep.subr.mxu0 0.0
            %539 = vmatpush2.msra.mxu0 0.0
            %540 = vmatprep.subr.mxu0 0.0
            %541 = vmatpush2.msra.mxu0 0.0
            %542 = vmatprep.subr.mxu0 0.0
            %543 = vmatpush2.msra.mxu0 0.0
            %544 = vmatprep.subr.mxu0 0.0
            %545 = vmatpush2.msra.mxu0 0.0
            %546 = vmatprep.subr.mxu0 0.0
            %547 = vmatpush2.msra.mxu0 0.0
            %548 = vmatprep.subr.mxu0 0.0
            %549 = vmatpush2.msra.mxu0 0.0
            %550 = vmatprep.subr.mxu0 0.0
            %551 = vmatpush2.msra.mxu0 0.0
            %552 = vmatprep.subr.mxu0 0.0
            %553 = vmatpush2.msra.mxu0 0.0
            %554 = vmatprep.subr.mxu0 0.0
            %555 = vmatpush2.msra.mxu0 0.0
            %556 = vmatprep.subr.mxu0 0.0
            %557 = vmatpush2.msra.mxu0 0.0
            %558 = vmatprep.subr.mxu0 0.0
            %559 = vmatpush2.msra.mxu0 0.0
            %560 = vmatprep.subr.mxu0 0.0
            %561 = vmatpush2.msra.mxu0 0.0
            %562 = vmatprep.subr.mxu0 0.0
            %563 = vmatpush2.msra.mxu0 0.0
            %564 = vmatprep.subr.mxu0 0.0
            %565 = vmatpush2.msra.mxu0 0.0
            %566 = vmatprep.subr.mxu0 0.0
            %567 = vmatpush2.msra.mxu0 0.0
            %568 = vmatprep.mubr.f32.mxu0 0.0
            %569 = vmatmul.mubr.f32.gmra.mxu0 %v493
            %v570 = vpop.f32.mrf.mxu0
            %v571 = vadd.f32 0.0, %v570
            %v572 = vpop.f32.mrf.mxu0
            %573 = vmatprep.mubr.f32.mxu0 0.0
            %574 = vmatmul.mubr.f32.gmra.mxu0 %v496
            %v575 = vpop.f32.mrf.mxu0
            %v576 = vadd.f32 0.0, %v575
            %v577 = vpop.f32.mrf.mxu0
            %578 = vmatprep.mubr.f32.mxu0 0.0
            %579 = vmatmul.mubr.f32.gmra.mxu0 %v499
            %v580 = vpop.f32.mrf.mxu0
            %v581 = vadd.f32 0.0, %v580
            %v582 = vpop.f32.mrf.mxu0
            %583 = vmatprep.mubr.f32.mxu0 0.0
            %584 = vmatmul.mubr.f32.gmra.mxu0 %v502
            %v585 = vpop.f32.mrf.mxu0
            %v586 = vadd.f32 0.0, %v585
            %v587 = vpop.f32.mrf.mxu0
            %588 = vdwg.mxu0
            %v590 = vsel %vm459, %v472, 0
            %v593 = vsel %vm459, %v473, 0
            %v596 = vsel %vm459, %v474, 0
            %v599 = vsel %vm459, %v475, 0
            %601 = vmatprep.subr.mxu0 0.0
            %602 = vmatpush1.msra.mxu0 0.0
            %603 = vmatprep.subr.mxu0 0.0
            %604 = vmatpush1.msra.mxu0 0.0
            %605 = vmatprep.subr.mxu0 0.0
            %606 = vmatpush1.msra.mxu0 0.0
            %607 = vmatprep.subr.mxu0 0.0
            %608 = vmatpush1.msra.mxu0 0.0
            %609 = vmatprep.subr.mxu0 0.0
            %610 = vmatpush1.msra.mxu0 0.0
            %611 = vmatprep.subr.mxu0 0.0
            %612 = vmatpush1.msra.mxu0 0.0
            %613 = vmatprep.subr.mxu0 0.0
            %614 = vmatpush1.msra.mxu0 0.0
            %615 = vmatprep.subr.mxu0 0.0
            %616 = vmatpush1.msra.mxu0 0.0
            %617 = vmatprep.subr.mxu0 0.0
            %618 = vmatpush1.msra.mxu0 0.0
            %619 = vmatprep.subr.mxu0 0.0
            %620 = vmatpush1.msra.mxu0 0.0
            %621 = vmatprep.subr.mxu0 0.0
            %622 = vmatpush1.msra.mxu0 0.0
            %623 = vmatprep.subr.mxu0 0.0
            %624 = vmatpush1.msra.mxu0 0.0
            %625 = vmatprep.subr.mxu0 0.0
            %626 = vmatpush1.msra.mxu0 %v586
            %627 = vmatprep.subr.mxu0 0.0
            %628 = vmatpush1.msra.mxu0 %v581
            %629 = vmatprep.subr.mxu0 0.0
            %630 = vmatpush1.msra.mxu0 %v576
            %631 = vmatprep.subr.mxu0 0.0
            %632 = vmatpush1.msra.mxu0 %v571
            %633 = vmatprep.subr.mxu0 0.0
            %634 = vmatpush2.msra.mxu0 0.0
            %635 = vmatprep.subr.mxu0 0.0
            %636 = vmatpush2.msra.mxu0 0.0
            %637 = vmatprep.subr.mxu0 0.0
            %638 = vmatpush2.msra.mxu0 0.0
            %639 = vmatprep.subr.mxu0 0.0
            %640 = vmatpush2.msra.mxu0 0.0
            %641 = vmatprep.subr.mxu0 0.0
            %642 = vmatpush2.msra.mxu0 0.0
            %643 = vmatprep.subr.mxu0 0.0
            %644 = vmatpush2.msra.mxu0 0.0
            %645 = vmatprep.subr.mxu0 0.0
            %646 = vmatpush2.msra.mxu0 0.0
            %647 = vmatprep.subr.mxu0 0.0
            %648 = vmatpush2.msra.mxu0 0.0
            %649 = vmatprep.subr.mxu0 0.0
            %650 = vmatpush2.msra.mxu0 0.0
            %651 = vmatprep.subr.mxu0 0.0
            %652 = vmatpush2.msra.mxu0 0.0
            %653 = vmatprep.subr.mxu0 0.0
            %654 = vmatpush2.msra.mxu0 0.0
            %655 = vmatprep.subr.mxu0 0.0
            %656 = vmatpush2.msra.mxu0 0.0
            %657 = vmatprep.subr.mxu0 0.0
            %658 = vmatpush2.msra.mxu0 0.0
            %659 = vmatprep.subr.mxu0 0.0
            %660 = vmatpush2.msra.mxu0 0.0
            %661 = vmatprep.subr.mxu0 0.0
            %662 = vmatpush2.msra.mxu0 0.0
            %663 = vmatprep.subr.mxu0 0.0
            %664 = vmatpush2.msra.mxu0 0.0
            %665 = vmatprep.mubr.f32.mxu0 0.0
            %666 = vmatmul.mubr.f32.gmra.mxu0 %v590
            %v667 = vpop.f32.mrf.mxu0
            %v668 = vadd.f32 0.0, %v667
            %v669 = vpop.f32.mrf.mxu0
            %670 = vmatprep.mubr.f32.mxu0 0.0
            %671 = vmatmul.mubr.f32.gmra.mxu0 %v593
            %v672 = vpop.f32.mrf.mxu0
            %v673 = vadd.f32 0.0, %v672
            %v674 = vpop.f32.mrf.mxu0
            %675 = vmatprep.mubr.f32.mxu0 0.0
            %676 = vmatmul.mubr.f32.gmra.mxu0 %v596
            %v677 = vpop.f32.mrf.mxu0
            %v678 = vadd.f32 0.0, %v677
            %v679 = vpop.f32.mrf.mxu0
            %680 = vmatprep.mubr.f32.mxu0 0.0
            %681 = vmatmul.mubr.f32.gmra.mxu0 %v599
            %v682 = vpop.f32.mrf.mxu0
            %v683 = vadd.f32 0.0, %v682
            %v684 = vpop.f32.mrf.mxu0
            %685 = vdwg.mxu0
            %v686 = vmul.f32 %v668, 0.5
            %v687 = vmul.f32 %v673, 0.5
            %v688 = vmul.f32 %v678, 0.5
            %v689 = vmul.f32 %v683, 0.5
            %v690 = vadd.f32 %v686, %v484
            %v691 = vadd.f32 %v687, %v485
            %v692 = vadd.f32 %v688, %v486
            %v693 = vadd.f32 %v689, %v487
            %v694 = vsel %vm459, %v690, -inf
            %695 = vmax.xlane.f32.xlu0 %v694
            %v696 = vpop.xlane.xlu0 %695
            %v697 = vsel %vm459, %v691, -inf
            %698 = vmax.xlane.f32.xlu0 %v697
            %v699 = vpop.xlane.xlu0 %698
            %v700 = vsel %vm459, %v692, -inf
            %701 = vmax.xlane.f32.xlu0 %v700
            %v702 = vpop.xlane.xlu0 %701
            %v703 = vsel %vm459, %v693, -inf
            %704 = vmax.xlane.f32.xlu0 %v703
            %v705 = vpop.xlane.xlu0 %704
            %v706 = vsub.f32 %v690, %v696
            %v707 = vsub.f32 %v691, %v699
            %v708 = vsub.f32 %v692, %v702
            %v709 = vsub.f32 %v693, %v705
            %v710 = vmul.f32 %v706, 1.442695
            %v711 = vpow.pop %v710
            %v712 = vmul.f32 %v707, 1.442695
            %v713 = vpow.pop %v712
            %v714 = vmul.f32 %v708, 1.442695
            %v715 = vpow.pop %v714
            %v716 = vmul.f32 %v709, 1.442695
            %v717 = vpow.pop %v716
            %v718 = vsel %vm459, %v711, 0.0
            %719 = vadd.xlane.f32.xlu0 %v718
            %v720 = vpop.xlane.xlu0 %719
            %v721 = vsel %vm459, %v713, 0.0
            %722 = vadd.xlane.f32.xlu0 %v721
            %v723 = vpop.xlane.xlu0 %722
            %v724 = vsel %vm459, %v715, 0.0
            %725 = vadd.xlane.f32.xlu0 %v724
            %v726 = vpop.xlane.xlu0 %725
            %v727 = vsel %vm459, %v717, 0.0
            %728 = vadd.xlane.f32.xlu0 %v727
            %v729 = vpop.xlane.xlu0 %728
            %v730 = vrcp.pop %v720
            %v731 = vrcp.pop %v723
            %v732 = vrcp.pop %v726
            %v733 = vrcp.pop %v729
            %v734 = vmul.f32 %v711, %v730
            %v735 = vmul.f32 %v713, %v731
            %v736 = vmul.f32 %v715, %v732
            %v737 = vmul.f32 %v717, %v733
            %v739 = vsel %vm459, %v734, 0
            %v742 = vsel %vm459, %v735, 0
            %v745 = vsel %vm459, %v736, 0
            %v748 = vsel %vm459, %v737, 0
            %750 = vmatprep.subr.mxu0 0.0
            %751 = vmatpush1.msra.mxu0 0.0
            %752 = vmatprep.subr.mxu0 0.0
            %753 = vmatpush1.msra.mxu0 0.0
            %754 = vmatprep.subr.mxu0 0.0
            %755 = vmatpush1.msra.mxu0 0.0
            %756 = vmatprep.subr.mxu0 0.0
            %757 = vmatpush1.msra.mxu0 0.0
            %758 = vmatprep.subr.mxu0 0.0
            %759 = vmatpush1.msra.mxu0 0.0
            %760 = vmatprep.subr.mxu0 0.0
            %761 = vmatpush1.msra.mxu0 0.0
            %762 = vmatprep.subr.mxu0 0.0
            %763 = vmatpush1.msra.mxu0 0.0
            %764 = vmatprep.subr.mxu0 0.0
            %765 = vmatpush1.msra.mxu0 0.0
            %766 = vmatprep.subr.mxu0 0.0
            %767 = vmatpush1.msra.mxu0 0.0
            %768 = vmatprep.subr.mxu0 0.0
            %769 = vmatpush1.msra.mxu0 0.0
            %770 = vmatprep.subr.mxu0 0.0
            %771 = vmatpush1.msra.mxu0 0.0
            %772 = vmatprep.subr.mxu0 0.0
            %773 = vmatpush1.msra.mxu0 0.0
            %774 = vmatprep.subr.mxu0 0.0
            %775 = vmatpush1.msra.mxu0 %v471
            %776 = vmatprep.subr.mxu0 0.0
            %777 = vmatpush1.msra.mxu0 %v470
            %778 = vmatprep.subr.mxu0 0.0
            %779 = vmatpush1.msra.mxu0 %v469
            %780 = vmatprep.subr.mxu0 0.0
            %781 = vmatpush1.msra.mxu0 %v468
            %782 = vmatprep.subr.mxu0 0.0
            %783 = vmatpush2.msra.mxu0 0.0
            %784 = vmatprep.subr.mxu0 0.0
            %785 = vmatpush2.msra.mxu0 0.0
            %786 = vmatprep.subr.mxu0 0.0
            %787 = vmatpush2.msra.mxu0 0.0
            %788 = vmatprep.subr.mxu0 0.0
            %789 = vmatpush2.msra.mxu0 0.0
            %790 = vmatprep.subr.mxu0 0.0
            %791 = vmatpush2.msra.mxu0 0.0
            %792 = vmatprep.subr.mxu0 0.0
            %793 = vmatpush2.msra.mxu0 0.0
            %794 = vmatprep.subr.mxu0 0.0
            %795 = vmatpush2.msra.mxu0 0.0
            %796 = vmatprep.subr.mxu0 0.0
            %797 = vmatpush2.msra.mxu0 0.0
            %798 = vmatprep.subr.mxu0 0.0
            %799 = vmatpush2.msra.mxu0 0.0
            %800 = vmatprep.subr.mxu0 0.0
            %801 = vmatpush2.msra.mxu0 0.0
            %802 = vmatprep.subr.mxu0 0.0
            %803 = vmatpush2.msra.mxu0 0.0
            %804 = vmatprep.subr.mxu0 0.0
            %805 = vmatpush2.msra.mxu0 0.0
            %806 = vmatprep.subr.mxu0 0.0
            %807 = vmatpush2.msra.mxu0 0.0
            %808 = vmatprep.subr.mxu0 0.0
            %809 = vmatpush2.msra.mxu0 0.0
            %810 = vmatprep.subr.mxu0 0.0
            %811 = vmatpush2.msra.mxu0 0.0
            %812 = vmatprep.subr.mxu0 0.0
            %813 = vmatpush2.msra.mxu0 0.0
            %814 = vmatprep.mubr.f32.mxu0 0.0
            %815 = vmatmul.mubr.f32.gmra.mxu0 %v739
            %v816 = vpop.f32.mrf.mxu0
            %v817 = vadd.f32 0.0, %v816
            %v818 = vpop.f32.mrf.mxu0
            %819 = vmatprep.mubr.f32.mxu0 0.0
            %820 = vmatmul.mubr.f32.gmra.mxu0 %v742
            %v821 = vpop.f32.mrf.mxu0
            %v822 = vadd.f32 0.0, %v821
            %v823 = vpop.f32.mrf.mxu0
            %824 = vmatprep.mubr.f32.mxu0 0.0
            %825 = vmatmul.mubr.f32.gmra.mxu0 %v745
            %v826 = vpop.f32.mrf.mxu0
            %v827 = vadd.f32 0.0, %v826
            %v828 = vpop.f32.mrf.mxu0
            %829 = vmatprep.mubr.f32.mxu0 0.0
            %830 = vmatmul.mubr.f32.gmra.mxu0 %v748
            %v831 = vpop.f32.mrf.mxu0
            %v832 = vadd.f32 0.0, %v831
            %v833 = vpop.f32.mrf.mxu0
            %834 = vdwg.mxu0
            %v836 = vsel %vm459, %v480, 0
            %v839 = vsel %vm459, %v481, 0
            %v842 = vsel %vm459, %v482, 0
            %v845 = vsel %vm459, %v483, 0
            %847 = vmatprep.subr.mxu0 0.0
            %848 = vmatpush1.msra.mxu0 0.0
            %849 = vmatprep.subr.mxu0 0.0
            %850 = vmatpush1.msra.mxu0 0.0
            %851 = vmatprep.subr.mxu0 0.0
            %852 = vmatpush1.msra.mxu0 0.0
            %853 = vmatprep.subr.mxu0 0.0
            %854 = vmatpush1.msra.mxu0 0.0
            %855 = vmatprep.subr.mxu0 0.0
            %856 = vmatpush1.msra.mxu0 0.0
            %857 = vmatprep.subr.mxu0 0.0
            %858 = vmatpush1.msra.mxu0 0.0
            %859 = vmatprep.subr.mxu0 0.0
            %860 = vmatpush1.msra.mxu0 0.0
            %861 = vmatprep.subr.mxu0 0.0
            %862 = vmatpush1.msra.mxu0 0.0
            %863 = vmatprep.subr.mxu0 0.0
            %864 = vmatpush1.msra.mxu0 0.0
            %865 = vmatprep.subr.mxu0 0.0
            %866 = vmatpush1.msra.mxu0 0.0
            %867 = vmatprep.subr.mxu0 0.0
            %868 = vmatpush1.msra.mxu0 0.0
            %869 = vmatprep.subr.mxu0 0.0
            %870 = vmatpush1.msra.mxu0 0.0
            %871 = vmatprep.subr.mxu0 0.0
            %872 = vmatpush1.msra.mxu0 %v832
            %873 = vmatprep.subr.mxu0 0.0
            %874 = vmatpush1.msra.mxu0 %v827
            %875 = vmatprep.subr.mxu0 0.0
            %876 = vmatpush1.msra.mxu0 %v822
            %877 = vmatprep.subr.mxu0 0.0
            %878 = vmatpush1.msra.mxu0 %v817
            %879 = vmatprep.subr.mxu0 0.0
            %880 = vmatpush2.msra.mxu0 0.0
            %881 = vmatprep.subr.mxu0 0.0
            %882 = vmatpush2.msra.mxu0 0.0
            %883 = vmatprep.subr.mxu0 0.0
            %884 = vmatpush2.msra.mxu0 0.0
            %885 = vmatprep.subr.mxu0 0.0
            %886 = vmatpush2.msra.mxu0 0.0
            %887 = vmatprep.subr.mxu0 0.0
            %888 = vmatpush2.msra.mxu0 0.0
            %889 = vmatprep.subr.mxu0 0.0
            %890 = vmatpush2.msra.mxu0 0.0
            %891 = vmatprep.subr.mxu0 0.0
            %892 = vmatpush2.msra.mxu0 0.0
            %893 = vmatprep.subr.mxu0 0.0
            %894 = vmatpush2.msra.mxu0 0.0
            %895 = vmatprep.subr.mxu0 0.0
            %896 = vmatpush2.msra.mxu0 0.0
            %897 = vmatprep.subr.mxu0 0.0
            %898 = vmatpush2.msra.mxu0 0.0
            %899 = vmatprep.subr.mxu0 0.0
            %900 = vmatpush2.msra.mxu0 0.0
            %901 = vmatprep.subr.mxu0 0.0
            %902 = vmatpush2.msra.mxu0 0.0
            %903 = vmatprep.subr.mxu0 0.0
            %904 = vmatpush2.msra.mxu0 0.0
            %905 = vmatprep.subr.mxu0 0.0
            %906 = vmatpush2.msra.mxu0 0.0
            %907 = vmatprep.subr.mxu0 0.0
            %908 = vmatpush2.msra.mxu0 0.0
            %909 = vmatprep.subr.mxu0 0.0
            %910 = vmatpush2.msra.mxu0 0.0
            %911 = vmatprep.mubr.f32.mxu0 0.0
            %912 = vmatmul.mubr.f32.gmra.mxu0 %v836
            %v913 = vpop.f32.mrf.mxu0
            %v914 = vadd.f32 0.0, %v913
            %v915 = vpop.f32.mrf.mxu0
            %916 = vmatprep.mubr.f32.mxu0 0.0
            %917 = vmatmul.mubr.f32.gmra.mxu0 %v839
            %v918 = vpop.f32.mrf.mxu0
            %v919 = vadd.f32 0.0, %v918
            %v920 = vpop.f32.mrf.mxu0
            %921 = vmatprep.mubr.f32.mxu0 0.0
            %922 = vmatmul.mubr.f32.gmra.mxu0 %v842
            %v923 = vpop.f32.mrf.mxu0
            %v924 = vadd.f32 0.0, %v923
            %v925 = vpop.f32.mrf.mxu0
            %926 = vmatprep.mubr.f32.mxu0 0.0
            %927 = vmatmul.mubr.f32.gmra.mxu0 %v845
            %v928 = vpop.f32.mrf.mxu0
            %v929 = vadd.f32 0.0, %v928
            %v930 = vpop.f32.mrf.mxu0
            %931 = vdwg.mxu0
            %932 = vst.msk [vmem:[#allocation3] sm:$0xff] %vm459, %v914
            %933 = vst.msk [vmem:[#allocation3 + $0x8] sm:$0xff] %vm459, %v919
            %934 = vst.msk [vmem:[#allocation3 + $0x10] sm:$0xff] %vm459, %v924
            %935 = vst.msk [vmem:[#allocation3 + $0x18] sm:$0xff] %vm459, %v929
          $region80: #{tpu_custom_call.1} parent=71 // pred_fallthru
            _
        $region72: #{tpu_custom_call.1} parent=47 // pred_fallthru
          _
        %p936 = scmp.eq.s32.totalorder %s32, 1
        // Predicated region
        $region81: #{tpu_custom_call.1} parent=47 // pred_check
          %p937 = pneg %p936
        $region82: #{tpu_custom_call.1} parent=47 // pred_check_branch
          %939 = sbr.rel (%p937) target = $region84
        $region83: #{tpu_custom_call.1} parent=47 // pred_region
          %v940 = vld [vmem:[%s334] sm:$0xff]
          %v941 = vld [vmem:[%s334 + $0x8] sm:$0xff]
          %v942 = vld [vmem:[%s334 + $0x10] sm:$0xff]
          %v943 = vld [vmem:[%s334 + $0x18] sm:$0xff]
          %v944 = vpack.c.bf16 %v941, %v940
          %v945 = vpack.c.bf16 %v943, %v942
          %v946 = vld [vmem:[#allocation3] sm:$0xff]
          %v947 = vld [vmem:[#allocation3 + $0x8] sm:$0xff]
          %v948 = vld [vmem:[#allocation3 + $0x10] sm:$0xff]
          %v949 = vld [vmem:[#allocation3 + $0x18] sm:$0xff]
          %v950 = vpack.c.bf16 %v947, %v946
          %v951 = vpack.c.bf16 %v949, %v948
          %v952 = vld [vmem:[%s5] sm:$0xff]
          %v953 = vld [vmem:[%s5 + $0x8] sm:$0xff]
          %v954 = vld [vmem:[%s5 + $0x10] sm:$0xff]
          %v955 = vld [vmem:[%s5 + $0x18] sm:$0xff]
          %957 = vset.pattern.permute.xlu0 0
          %958 = vperm.xlu0 %957, %v952
          %v959 = vpop.permute.xlu0 %958
          %962 = vset.pattern.permute.xlu0 0
          %963 = vperm.xlu0 %962, %v953
          %v964 = vpop.permute.xlu0 %963
          %967 = vset.pattern.permute.xlu0 0
          %968 = vperm.xlu0 %967, %v954
          %v969 = vpop.permute.xlu0 %968
          %972 = vset.pattern.permute.xlu0 0
          %973 = vperm.xlu0 %972, %v955
          %v974 = vpop.permute.xlu0 %973
          %vm976 = vcmask 261120
          %v978 = vsel %vm976, %v950, 0
          %v981 = vsel %vm976, %v951, 0
          %983 = vmatprep.subr.bf16.mxu0 0
          %984 = vmatpush1.bf16.msra.mxu0 0
          %985 = vmatprep.subr.bf16.mxu0 0
          %986 = vmatpush1.bf16.msra.mxu0 0
          %987 = vmatprep.subr.bf16.mxu0 0
          %988 = vmatpush1.bf16.msra.mxu0 0
          %989 = vmatprep.subr.bf16.mxu0 0
          %990 = vmatpush1.bf16.msra.mxu0 0
          %991 = vmatprep.subr.bf16.mxu0 0
          %992 = vmatpush1.bf16.msra.mxu0 0
          %993 = vmatprep.subr.bf16.mxu0 0
          %994 = vmatpush1.bf16.msra.mxu0 0
          %995 = vmatprep.subr.bf16.mxu0 0
          %996 = vmatpush1.bf16.msra.mxu0 %v945
          %997 = vmatprep.subr.bf16.mxu0 0
          %998 = vmatpush1.bf16.msra.mxu0 %v944
          %999 = vmatprep.subr.bf16.mxu0 0
          %1000 = vmatpush2.bf16.msra.mxu0 0
          %1001 = vmatprep.subr.bf16.mxu0 0
          %1002 = vmatpush2.bf16.msra.mxu0 0
          %1003 = vmatprep.subr.bf16.mxu0 0
          %1004 = vmatpush2.bf16.msra.mxu0 0
          %1005 = vmatprep.subr.bf16.mxu0 0
          %1006 = vmatpush2.bf16.msra.mxu0 0
          %1007 = vmatprep.subr.bf16.mxu0 0
          %1008 = vmatpush2.bf16.msra.mxu0 0
          %1009 = vmatprep.subr.bf16.mxu0 0
          %1010 = vmatpush2.bf16.msra.mxu0 0
          %1011 = vmatprep.subr.bf16.mxu0 0
          %1012 = vmatpush2.bf16.msra.mxu0 0
          %1013 = vmatprep.subr.bf16.mxu0 0
          %1014 = vmatpush2.bf16.msra.mxu0 0
          %1015 = vmatprep.mubr.bf16.mxu0 0
          %1016 = vmatmul.mubr.bf16.gmra.mxu0 %v978
          %v1017 = vpop.f32.mrf.mxu0
          %v1018 = vadd.f32 %v959, %v1017
          %v1019 = vpop.f32.mrf.mxu0
          %v1020 = vpop.f32.mrf.mxu0
          %v1021 = vadd.f32 %v964, %v1020
          %v1022 = vpop.f32.mrf.mxu0
          %1023 = vmatprep.mubr.bf16.mxu0 0
          %1024 = vmatmul.mubr.bf16.gmra.mxu0 %v981
          %v1025 = vpop.f32.mrf.mxu0
          %v1026 = vadd.f32 %v969, %v1025
          %v1027 = vpop.f32.mrf.mxu0
          %v1028 = vpop.f32.mrf.mxu0
          %v1029 = vadd.f32 %v974, %v1028
          %v1030 = vpop.f32.mrf.mxu0
          %1031 = vdwg.mxu0
          %1032 = vst [vmem:[%s380] sm:$0xff] %v1018
          %1033 = vst [vmem:[%s380 + $0x8] sm:$0xff] %v1021
          %1034 = vst [vmem:[%s380 + $0x10] sm:$0xff] %v1026
          %1035 = vst [vmem:[%s380 + $0x18] sm:$0xff] %v1029
        $region84: #{tpu_custom_call.1} parent=47 // pred_fallthru
          _
        %s1036 = sand.u32 %s211, 1
        %s1037 = scalar_lea.sflag [#allocation6], %s1036
        %s1038 = sand.u32 %s211, 1
        %s1039 = smul.addr %s1038, 32
        %s1040 = scalar_lea.vmem [#allocation13], %s1039
        // Predicated region
        $region85: #{tpu_custom_call.1} parent=47 // pred_check
          %p1041 = pneg %p221
        $region86: #{tpu_custom_call.1} parent=47 // pred_check_branch
          %1043 = sbr.rel (%p1041) target = $region88
        $region87: #{tpu_custom_call.1} parent=47 // pred_region
          %s1044 = smul.u32 %s33, %s32
          %s1046 = ssub.s32 512, 512
          %1047 = vsyncadd %s1037, %s1046
          %s1048 = smul.addr %s31, 8
          %s1049 = sadd.s32 %s1044, %s1048
          %s1050 = smul.addr %s1049, 128
          %s1051 = scalar_lea.hbm %s7, %s1050
          %s1052 = sshll.u32 %s1040, 4
          %s1053 = int_to_ptr.vmem [resolvable:$true] %s1052
          %1058 = dma.vmem_to_hbm [thread:$0]  %s1053, 512, %s1051, %s1037, 128, 256, 8
        $region88: #{tpu_custom_call.1} parent=47 // pred_fallthru
          _
      $region48: #{tpu_custom_call.1} parent=5 // pred_fallthru
        _
      %p1059 = scmp.le.s32.totalorder 2, %s21
      // Predicated region
      $region89: #{tpu_custom_call.1} parent=5 // pred_check
        %p1060 = pneg %p1059
      $region90: #{tpu_custom_call.1} parent=5 // pred_check_branch
        %1062 = sbr.rel (%p1060) target = $region92
      $region91: #{tpu_custom_call.1} parent=5 // pred_region
        %s1063 = ssub.s32 %s21, 2
        // Predicated region
        $region93: #{tpu_custom_call.1} parent=91 // pred_check
          %p1064 = pneg %p227
        $region94: #{tpu_custom_call.1} parent=91 // pred_check_branch
          %1066 = sbr.rel (%p1064) target = $region96
        $region95: #{tpu_custom_call.1} parent=91 // pred_region
          %s1067 = sand.u32 %s212, 1
          %s1068 = scalar_lea.sflag [#allocation6], %s1067
          %s1069 = sand.u32 %s212, 1
          %s1070 = smul.addr %s1069, 32
          %s1071 = scalar_lea.vmem [#allocation13], %s1070
          %1072 = dma.done %s1068, 512
        $region96: #{tpu_custom_call.1} parent=91 // pred_fallthru
          _
      $region92: #{tpu_custom_call.1} parent=5 // pred_fallthru
        _
    $region6: #{tpu_custom_call.1} parent=1 // loop_footer
      %s25 = sadd.s32 1, %s21
    $region7: #{tpu_custom_call.1} parent=1 // loop_footer_branch
      %20 = sbr.rel target = $region3
    $region8: #{tpu_custom_call.1} parent=1 // loop_exit
      _
    %1073 = vsyncpa [#allocation5], 1
    %s1074 = scalar_lea.sflag [#allocation5], 1
    %1075 = vsyncpa %s1074, 1
    %1076 = vsyncpa [#allocation8], 1
    %1077 = vsyncpa [#allocation11], 1
    %1078 = vsyncpa [#allocation6], 1
    %s1079 = scalar_lea.sflag [#allocation6], 1
    %1080 = vsyncpa %s1079, 1

</llo_original>
